<compile_context>
chip_gen: v5e
topology: v5e:2x2
jax: 0.10.0
libtpu: 0.0.40
codegen_flags: <defaults>
</compile_context>

<pallas_src>
import jax
import jax.numpy as jnp
from jax.experimental import pallas as pl
from jax.experimental.pallas import tpu as pltpu

ALPHABET = 26
LANE = 128
SMALL_BATCH_MAX = 512   # whole-array (no-grid) path at or below this batch
MAX_TILE = 1024         # batch-tile cap for the grid path (~3 MiB/step VMEM)
MIN_STEPS = 8           # target >= 8 grid steps (>= 4 per v7x TensorCore)


def _round_up(v, m):
    return (v + m - 1) // m * m


def _hangman_mlp_kernel(x_ref, w1_ref, b1_ref, w2_ref, b2_ref, out_ref):
    # Cast activations to bf16 in-kernel (no separate HBM pad/cast pass).
    x = x_ref[...].astype(jnp.bfloat16)
    # fc1: bf16 operands on the MXU, f32 accumulation.
    h = jnp.dot(x, w1_ref[...], preferred_element_type=jnp.float32)
    # Bias + ReLU in f32 on the VPU (safe on v5e: no bf16 VPU path needed).
    h = jnp.maximum(h + b1_ref[...], 0.0)
    # fc2: bf16 operands again; bias add in f32; bf16 store halves writeback.
    o = jnp.dot(h.astype(jnp.bfloat16), w2_ref[...],
                preferred_element_type=jnp.float32)
    out_ref[...] = (o + b2_ref[...]).astype(out_ref.dtype)


def prepare_params(w1, b1, w2, b2):
    """One-time prep: weights -> bf16; output dims zero-padded to 128 lanes.

    Weights use (in_features, out_features) layout (transposed vs. PyTorch).
    The contraction dim (d_in) is intentionally left unpadded."""
    d_in, h = w1.shape
    a = w2.shape[1]
    h_p = _round_up(h, LANE)
    a_p = _round_up(a, LANE)
    w1_p = jnp.zeros((d_in, h_p), jnp.bfloat16).at[:, :h].set(
        w1.astype(jnp.bfloat16))
    w2_p = jnp.zeros((h_p, a_p), jnp.bfloat16).at[:h, :a].set(
        w2.astype(jnp.bfloat16))
    b1_p = jnp.zeros((1, h_p), jnp.float32).at[0, :h].set(
        b1.reshape(-1).astype(jnp.float32))
    b2_p = jnp.zeros((1, a_p), jnp.float32).at[0, :a].set(
        b2.reshape(-1).astype(jnp.float32))
    return w1_p, b1_p, w2_p, b2_p


def _pick_tile(B):
    # Aim for >= MIN_STEPS grid steps; tile rows a multiple of 256; capped so
    # per-step VMEM stays ~3 MiB (safe under v5e's 16 MiB default scoped VMEM).
    tb = _round_up(pl.cdiv(B, MIN_STEPS), 256)
    return max(256, min(MAX_TILE, tb))


def hangman_nn_forward(x, w1_p, b1_p, w2_p, b2_p, *, alphabet=ALPHABET):
    """x: (B, num_letters*27) f32; params from prepare_params(). -> (B, 26) f32."""
    B, d_in = x.shape
    h_p = w1_p.shape[1]
    a_p = w2_p.shape[1]
    out_shape = jax.ShapeDtypeStruct((B, a_p), jnp.bfloat16)

    if B <= SMALL_BATCH_MAX:
        # Tiny batch: one whole-array VMEM block per operand, no grid, no
        # pipeline overhead.  Explicit VMEM placement.
        vmem = pl.BlockSpec(memory_space=pltpu.MemorySpace.VMEM)
        out = pl.pallas_call(
            _hangman_mlp_kernel,
            out_shape=out_shape,
            in_specs=[vmem] * 5,
            out_specs=vmem,
        )(x, w1_p, b1_p, w2_p, b2_p)
    else:
        # Large batch: stream batch tiles; weights/biases resident across steps.
        tb = _pick_tile(B)
        out = pl.pallas_call(
            _hangman_mlp_kernel,
            out_shape=out_shape,
            grid_spec=pl.GridSpec(
                grid=(pl.cdiv(B, tb),),
                in_specs=[
                    pl.BlockSpec((tb, d_in), lambda i: (i, 0)),
                    pl.BlockSpec((d_in, h_p), lambda i: (0, 0)),
                    pl.BlockSpec((1, h_p), lambda i: (0, 0)),
                    pl.BlockSpec((h_p, a_p), lambda i: (0, 0)),
                    pl.BlockSpec((1, a_p), lambda i: (0, 0)),
                ],
                out_specs=pl.BlockSpec((tb, a_p), lambda i: (i, 0)),
            ),
            compiler_params=pltpu.CompilerParams(
                dimension_semantics=("parallel",),
            ),
        )(x, w1_p, b1_p, w2_p, b2_p)

    # Slice off lane padding and upcast the real logits back to f32.
    return out[:, :alphabet].astype(jnp.float32)


def init_params(key, num_letters, hidden_size, alphabet=ALPHABET):
    """PyTorch nn.Linear-style init; weights returned as (in_features, out_features)."""
    d_in = num_letters * (alphabet + 1)
    k1, k2, k3, k4 = jax.random.split(key, 4)
    bound1 = 1.0 / jnp.sqrt(d_in)
    bound2 = 1.0 / jnp.sqrt(hidden_size)
    w1 = jax.random.uniform(k1, (d_in, hidden_size), jnp.float32, -bound1, bound1)
    b1 = jax.random.uniform(k2, (hidden_size,), jnp.float32, -bound1, bound1)
    w2 = jax.random.uniform(k3, (hidden_size, alphabet), jnp.float32, -bound2, bound2)
    b2 = jax.random.uniform(k4, (alphabet,), jnp.float32, -bound2, bound2)
    return w1, b1, w2, b2


def reference_forward(x, w1, b1, w2, b2):
    """Pure-JAX reference with the same bf16-operand / f32-accumulate numerics."""
    h = jnp.dot(x.astype(jnp.bfloat16), w1.astype(jnp.bfloat16),
                preferred_element_type=jnp.float32) + b1.reshape(1, -1)
    h = jnp.maximum(h, 0.0)
    return jnp.dot(h.astype(jnp.bfloat16), w2.astype(jnp.bfloat16),
                   preferred_element_type=jnp.float32) + b2.reshape(1, -1)


if __name__ == "__main__":
    key = jax.random.PRNGKey(0)
    num_letters = 8
    hidden_size = 32
    batch = 2

    kx, kp, kb, ku = jax.random.split(key, 4)
    d_in = num_letters * (ALPHABET + 1)
    x = jax.random.uniform(kx, (batch, d_in), jnp.float32)
    w1, b1, w2, b2 = init_params(kp, num_letters, hidden_size)

    # One-time parameter prep (hoisted out of the per-call forward).
    params = prepare_params(w1, b1, w2, b2)
    fwd = jax.jit(hangman_nn_forward)

    # Tolerance: kernel output additionally rounds final logits to bf16.
    atol = rtol = 1e-2

    # Small-batch (no-grid, whole-array VMEM) path.
    out = jax.block_until_ready(fwd(x, *params))
    ref = reference_forward(x, w1, b1, w2, b2)
    assert out.shape == (batch, ALPHABET), out.shape
    assert jnp.allclose(out, ref, atol=atol, rtol=rtol), "small-batch mismatch"

    # Batch-tiled (grid) path: 8 grid steps (4 per v7x TensorCore), resident weights.
    big_batch = 4096
    xb = jax.random.uniform(kb, (big_batch, d_in), jnp.float32)
    out_b = jax.block_until_ready(fwd(xb, *params))
    ref_b = reference_forward(xb, w1, b1, w2, b2)
    assert out_b.shape == (big_batch, ALPHABET), out_b.shape
    assert jnp.allclose(out_b, ref_b, atol=atol, rtol=rtol), "tiled-batch mismatch"

    # Uneven batch: grid sized with pl.cdiv, partial last block masked by Pallas.
    odd_batch = 1300
    xu = jax.random.uniform(ku, (odd_batch, d_in), jnp.float32)
    out_u = jax.block_until_ready(fwd(xu, *params))
    ref_u = reference_forward(xu, w1, b1, w2, b2)
    assert out_u.shape == (odd_batch, ALPHABET), out_u.shape
    assert jnp.allclose(out_u, ref_u, atol=atol, rtol=rtol), "uneven-batch mismatch"

    print("KERNEL_OK")
</pallas_src>

<mosaic_0001>
module attributes {stable_mosaic.version = 11 : i64} {
  func.func @_hangman_mlp_kernel(%arg0: memref<2x216xf32, #tpu.memory_space<vmem>>, %arg1: memref<216x128xbf16, #tpu.memory_space<vmem>>, %arg2: memref<1x128xf32, #tpu.memory_space<vmem>>, %arg3: memref<128x128xbf16, #tpu.memory_space<vmem>>, %arg4: memref<1x128xf32, #tpu.memory_space<vmem>>, %arg5: memref<2x128xbf16, #tpu.memory_space<vmem>>) attributes {dimension_semantics = [], scalar_prefetch = 0 : i64, scratch_operands = 0 : i64, tpu.core_type = #tpu.core_type<tc>} {
    %c0 = arith.constant 0 : index
    %c0_0 = arith.constant 0 : index
    %0 = vector.load %arg0[%c0, %c0_0] : memref<2x216xf32, #tpu.memory_space<vmem>>, vector<2x216xf32>
    %1 = arith.truncf %0 : vector<2x216xf32> to vector<2x216xbf16>
    %c0_1 = arith.constant 0 : index
    %c0_2 = arith.constant 0 : index
    %2 = vector.load %arg1[%c0_1, %c0_2] : memref<216x128xbf16, #tpu.memory_space<vmem>>, vector<216x128xbf16>
    %cst = arith.constant dense<0.000000e+00> : vector<2x128xf32>
    %3 = tpu.matmul %1, %2, %cst {dimension_numbers = #tpu.dot_dimension_numbers<[1], [0], [0], [1], [0, 0, 1, 1], [], []>} : vector<2x216xbf16>, vector<216x128xbf16>, vector<2x128xf32> -> vector<2x128xf32>
    %c0_3 = arith.constant 0 : index
    %c0_4 = arith.constant 0 : index
    %4 = vector.load %arg2[%c0_3, %c0_4] : memref<1x128xf32, #tpu.memory_space<vmem>>, vector<1x128xf32>
    %5 = vector.broadcast %4 : vector<1x128xf32> to vector<2x128xf32>
    %6 = arith.addf %3, %5 : vector<2x128xf32>
    %cst_5 = arith.constant 0.000000e+00 : f32
    %7 = vector.broadcast %cst_5 : f32 to vector<2x128xf32>
    %8 = arith.maximumf %6, %7 : vector<2x128xf32>
    %9 = arith.truncf %8 : vector<2x128xf32> to vector<2x128xbf16>
    %c0_6 = arith.constant 0 : index
    %c0_7 = arith.constant 0 : index
    %10 = vector.load %arg3[%c0_6, %c0_7] : memref<128x128xbf16, #tpu.memory_space<vmem>>, vector<128x128xbf16>
    %cst_8 = arith.constant dense<0.000000e+00> : vector<2x128xf32>
    %11 = tpu.matmul %9, %10, %cst_8 {dimension_numbers = #tpu.dot_dimension_numbers<[1], [0], [0], [1], [0, 0, 1, 1], [], []>} : vector<2x128xbf16>, vector<128x128xbf16>, vector<2x128xf32> -> vector<2x128xf32>
    %c0_9 = arith.constant 0 : index
    %c0_10 = arith.constant 0 : index
    %12 = vector.load %arg4[%c0_9, %c0_10] : memref<1x128xf32, #tpu.memory_space<vmem>>, vector<1x128xf32>
    %13 = vector.broadcast %12 : vector<1x128xf32> to vector<2x128xf32>
    %14 = arith.addf %11, %13 : vector<2x128xf32>
    %15 = arith.truncf %14 : vector<2x128xf32> to vector<2x128xbf16>
    %c0_11 = arith.constant 0 : index
    %c0_12 = arith.constant 0 : index
    %16 = vector.load %arg5[%c0_11, %c0_12] : memref<2x128xbf16, #tpu.memory_space<vmem>>, vector<2x128xbf16>
    tpu.vector_store %arg5[%c0_11, %c0_12], %15 {strides = array<i32>} : memref<2x128xbf16, #tpu.memory_space<vmem>>, vector<2x128xbf16>,
    return
  }
}

</mosaic_0001>

<llo_original>
// kernel: hangman_nn_forward.1
$region0: #{hangman_nn_forward.1}
  #allocation0 [shape = 'u32[]', space=smem, size = 0x4, offset = 0x4, fixed_abs, tag = 'smem constant byte address 0x4 - core index']
  #allocation1 [shape = 'u32[72,128]{1,0:T(1,128)}', space=vmem, size = 0x9000, scoped, tag = 'internal scratch']
  %s0 = inlined_call_operand.hbm [shape: f32[2,216], index: 0, kind: input, shape index: {}]
  %s1 = inlined_call_operand.hbm [shape: bf16[216,128], index: 1, kind: input, shape index: {}]
  %s2 = inlined_call_operand.vmem [shape: f32[1,128], index: 2, kind: input, shape index: {}]
  %s3 = inlined_call_operand.hbm [shape: bf16[128,128], index: 3, kind: input, shape index: {}]
  %s4 = inlined_call_operand.vmem [shape: f32[1,128], index: 4, kind: input, shape index: {}]
  %s5 = inlined_call_operand.vmem [shape: bf16[2,128], index: 5, kind: output, shape index: {}]
  %s6 = sld [smem:[#allocation0]]
  $region42: #{hangman_nn_forward.1} parent=0
    _
  %s8 = ssub.s32 1, %s6
  %s9 = scalar_select 0, %s8, %s6
  $region1: #{hangman_nn_forward.1} parent=0
    #allocation2 [shape = 'u8[2048]{0}', space=vmem, size = 0x800, scoped, tag = 'input window, operand 0, single buffered']
    #allocation3 [shape = 's32[1]{0}', space=sflag, size = 0x4, scoped, tag = 'scoped memory for hangman_nn_forward.1']
    #allocation4 [shape = 'u8[55296]{0}', space=vmem, size = 0xd800, scoped, tag = 'input window, operand 1, single buffered']
    #allocation5 [shape = 's32[1]{0}', space=sflag, size = 0x4, scoped, tag = 'scoped memory for hangman_nn_forward.1']
    #allocation6 [shape = 'u8[32768]{0}', space=vmem, size = 0x8000, scoped, tag = 'input window, operand 3, single buffered']
    %10 = vsyncpa [#allocation3], 0
    %11 = vsyncpa [#allocation5], 0
    // Predicated region
    $region2: #{hangman_nn_forward.1} parent=1 // pred_check
      _
    $region3: #{hangman_nn_forward.1} parent=1 // pred_check_branch
      %13 = sbr.rel (0) target = $region5
    $region4: #{hangman_nn_forward.1} parent=1 // pred_region
      %15 = vsyncadd [#allocation3], 0
      %s17 = sshll.u32 %s0, 4
      %s18 = int_to_ptr.hbm [resolvable:$true] %s17
      %s19 = sshll.u32 [#allocation2], 4
      %s20 = int_to_ptr.vmem [resolvable:$true] %s19
      %22 = dma.hbm_to_vmem [thread:$0]  %s18, 64, %s20, [#allocation3]
    $region5: #{hangman_nn_forward.1} parent=1 // pred_fallthru
      _
    // Predicated region
    $region6: #{hangman_nn_forward.1} parent=1 // pred_check
      _
    $region7: #{hangman_nn_forward.1} parent=1 // pred_check_branch
      %24 = sbr.rel (0) target = $region9
    $region8: #{hangman_nn_forward.1} parent=1 // pred_region
      %26 = vsyncadd [#allocation5], 0
      %s27 = sshll.u32 %s1, 4
      %s28 = int_to_ptr.hbm [resolvable:$true] %s27
      %s29 = sshll.u32 [#allocation4], 4
      %s30 = int_to_ptr.vmem [resolvable:$true] %s29
      %35 = dma.hbm_to_vmem [thread:$0]  %s28, 1728, %s30, [#allocation5], 64, 64, 4
    $region9: #{hangman_nn_forward.1} parent=1 // pred_fallthru
      _
    // Predicated region
    $region10: #{hangman_nn_forward.1} parent=1 // pred_check
      _
    $region11: #{hangman_nn_forward.1} parent=1 // pred_check_branch
      %37 = sbr.rel (0) target = $region13
    $region12: #{hangman_nn_forward.1} parent=1 // pred_region
      _
    $region13: #{hangman_nn_forward.1} parent=1 // pred_fallthru
      _
    // Predicated region
    $region14: #{hangman_nn_forward.1} parent=1 // pred_check
      _
    $region15: #{hangman_nn_forward.1} parent=1 // pred_check_branch
      %39 = sbr.rel (0) target = $region17
    $region16: #{hangman_nn_forward.1} parent=1 // pred_region
      %41 = vsyncadd [#allocation5], 0
      %s42 = sshll.u32 %s3, 4
      %s43 = int_to_ptr.hbm [resolvable:$true] %s42
      %s44 = sshll.u32 [#allocation6], 4
      %s45 = int_to_ptr.vmem [resolvable:$true] %s44
      %50 = dma.hbm_to_vmem [thread:$0]  %s43, 1024, %s45, [#allocation5], 64, 64, 4
    $region17: #{hangman_nn_forward.1} parent=1 // pred_fallthru
      _
    // Predicated region
    $region18: #{hangman_nn_forward.1} parent=1 // pred_check
      _
    $region19: #{hangman_nn_forward.1} parent=1 // pred_check_branch
      %52 = sbr.rel (0) target = $region21
    $region20: #{hangman_nn_forward.1} parent=1 // pred_region
      _
    $region21: #{hangman_nn_forward.1} parent=1 // pred_fallthru
      _
    // Predicated region
    $region22: #{hangman_nn_forward.1} parent=1 // pred_check
      _
    $region23: #{hangman_nn_forward.1} parent=1 // pred_check_branch
      %54 = sbr.rel (0) target = $region25
    $region24: #{hangman_nn_forward.1} parent=1 // pred_region
      %56 = dma.done [#allocation3], 64
    $region25: #{hangman_nn_forward.1} parent=1 // pred_fallthru
      _
    // Predicated region
    $region26: #{hangman_nn_forward.1} parent=1 // pred_check
      _
    $region27: #{hangman_nn_forward.1} parent=1 // pred_check_branch
      %58 = sbr.rel (0) target = $region29
    $region28: #{hangman_nn_forward.1} parent=1 // pred_region
      %60 = dma.done [#allocation5], 1728
    $region29: #{hangman_nn_forward.1} parent=1 // pred_fallthru
      _
    // Predicated region
    $region30: #{hangman_nn_forward.1} parent=1 // pred_check
      _
    $region31: #{hangman_nn_forward.1} parent=1 // pred_check_branch
      %62 = sbr.rel (0) target = $region33
    $region32: #{hangman_nn_forward.1} parent=1 // pred_region
      %64 = dma.done [#allocation5], 1024
    $region33: #{hangman_nn_forward.1} parent=1 // pred_fallthru
      _
    %v66 = vld [vmem:[#allocation2] sm:$0xf]
    %68 = vst [vmem:[#allocation1] ss:$4 sm:$0xff] %v66
    %v69 = vld.sshfl [vmem:[#allocation1] sm:$0xff pattern:$0x73625140]
    %v70 = vld.sshfl [vmem:[#allocation1 + $0x8] sm:$0xff pattern:$0x73625140]
    %v73 = vpack.c.bf16 %v69, %v69
    %v74 = vpack.c.bf16 %v70, %v70
    %v75 = vld [vmem:[#allocation4] sm:$0xf]
    %v76 = vld [vmem:[#allocation4 + $0x4] sm:$0xf]
    %v77 = vld [vmem:[#allocation4 + $0x8] sm:$0xf]
    %v78 = vld [vmem:[#allocation4 + $0xc] sm:$0xf]
    %v79 = vld [vmem:[#allocation4 + $0x10] sm:$0xf]
    %v80 = vld [vmem:[#allocation4 + $0x14] sm:$0xf]
    %v81 = vld [vmem:[#allocation4 + $0x18] sm:$0xf]
    %v82 = vld [vmem:[#allocation4 + $0x1c] sm:$0xf]
    %v83 = vld [vmem:[#allocation4 + $0x20] sm:$0xf]
    %v84 = vld [vmem:[#allocation4 + $0x24] sm:$0xf]
    %v85 = vld [vmem:[#allocation4 + $0x28] sm:$0xf]
    %v86 = vld [vmem:[#allocation4 + $0x2c] sm:$0xf]
    %v87 = vld [vmem:[#allocation4 + $0x30] sm:$0xf]
    %v88 = vld [vmem:[#allocation4 + $0x34] sm:$0xf]
    %v89 = vld [vmem:[#allocation4 + $0x38] sm:$0xf]
    %v90 = vld [vmem:[#allocation4 + $0x3c] sm:$0xf]
    %v91 = vld [vmem:[#allocation4 + $0x40] sm:$0xf]
    %v92 = vld [vmem:[#allocation4 + $0x44] sm:$0xf]
    %v93 = vld [vmem:[#allocation4 + $0x48] sm:$0xf]
    %v94 = vld [vmem:[#allocation4 + $0x4c] sm:$0xf]
    %v95 = vld [vmem:[#allocation4 + $0x50] sm:$0xf]
    %v96 = vld [vmem:[#allocation4 + $0x54] sm:$0xf]
    %v97 = vld [vmem:[#allocation4 + $0x58] sm:$0xf]
    %v98 = vld [vmem:[#allocation4 + $0x5c] sm:$0xf]
    %v99 = vld [vmem:[#allocation4 + $0x60] sm:$0xf]
    %v100 = vld [vmem:[#allocation4 + $0x64] sm:$0xf]
    %v101 = vld [vmem:[#allocation4 + $0x68] sm:$0xf]
    %v102 = vld [vmem:[%s2] sm:$0x1]
    %v104 = vperm.slane %v102, 0
    %v133 = vunpack.c.l.b16 %v75
    %v134 = vunpack.c.l.b16 %v76
    %v135 = vunpack.c.l.b16 %v77
    %v136 = vunpack.c.l.b16 %v78
    %v137 = vunpack.c.l.b16 %v79
    %v138 = vunpack.c.l.b16 %v80
    %v139 = vunpack.c.l.b16 %v81
    %v140 = vunpack.c.l.b16 %v82
    %v141 = vunpack.c.l.b16 %v83
    %v142 = vunpack.c.l.b16 %v84
    %v143 = vunpack.c.l.b16 %v85
    %v144 = vunpack.c.l.b16 %v86
    %v145 = vunpack.c.l.b16 %v87
    %v146 = vunpack.c.l.b16 %v88
    %v147 = vunpack.c.l.b16 %v89
    %v148 = vunpack.c.l.b16 %v90
    %v149 = vunpack.c.l.b16 %v91
    %v150 = vunpack.c.l.b16 %v92
    %v151 = vunpack.c.l.b16 %v93
    %v152 = vunpack.c.l.b16 %v94
    %v153 = vunpack.c.l.b16 %v95
    %v154 = vunpack.c.l.b16 %v96
    %v155 = vunpack.c.l.b16 %v97
    %v156 = vunpack.c.l.b16 %v98
    %v157 = vunpack.c.l.b16 %v99
    %v158 = vunpack.c.l.b16 %v100
    %v159 = vunpack.c.l.b16 %v101
    %v160 = vpack.c.b16 %v134, %v133
    %v161 = vpack.c.b16 %v136, %v135
    %v162 = vpack.c.b16 %v138, %v137
    %v163 = vpack.c.b16 %v140, %v139
    %v164 = vpack.c.b16 %v142, %v141
    %v165 = vpack.c.b16 %v144, %v143
    %v166 = vpack.c.b16 %v146, %v145
    %v167 = vpack.c.b16 %v148, %v147
    %v168 = vpack.c.b16 %v150, %v149
    %v169 = vpack.c.b16 %v152, %v151
    %v170 = vpack.c.b16 %v154, %v153
    %v171 = vpack.c.b16 %v156, %v155
    %v172 = vpack.c.b16 %v158, %v157
    %v173 = vpack.c.b16 %v159, %v159
    %vm187 = vcmask 719872
    %v189 = vsel %vm187, %v74, 0
    %vm191 = vcmask 1043456
    %v193 = vsel %vm191, %v173, 0
    %195 = vmatpush.bf16.msra.mxu0 %v167
    %196 = vmatpush.bf16.msra.mxu0 %v166
    %197 = vmatpush.bf16.msra.mxu0 %v165
    %198 = vmatpush.bf16.msra.mxu0 %v164
    %199 = vmatpush.bf16.msra.mxu0 %v163
    %200 = vmatpush.bf16.msra.mxu0 %v162
    %201 = vmatpush.bf16.msra.mxu0 %v161
    %202 = vmatpush.bf16.msra.mxu0 %v160
    %203 = vmatmul.bf16.gmra.mxu0 %v73
    %v204 = vpop.f32.mrf.mxu0
    %v205 = vadd.f32 %v104, %v204
    %v206 = vpop.f32.mrf.mxu0
    %207 = vdwg.mxu0
    %208 = vmatpush.bf16.msra.mxu0 0
    %209 = vmatpush.bf16.msra.mxu0 0
    %210 = vmatpush.bf16.msra.mxu0 %v193
    %211 = vmatpush.bf16.msra.mxu0 %v172
    %212 = vmatpush.bf16.msra.mxu0 %v171
    %213 = vmatpush.bf16.msra.mxu0 %v170
    %214 = vmatpush.bf16.msra.mxu0 %v169
    %215 = vmatpush.bf16.msra.mxu0 %v168
    %216 = vmatmul.bf16.gmra.mxu0 %v189
    %v217 = vpop.f32.mrf.mxu0
    %v218 = vadd.f32 %v205, %v217
    %v219 = vpop.f32.mrf.mxu0
    %220 = vdwg.mxu0
    %v221 = vmax.f32 %v218, 0.0
    %v222 = vpack.c.bf16 %v221, %v221
    %v223 = vld [vmem:[#allocation6] sm:$0xf]
    %v224 = vld [vmem:[#allocation6 + $0x4] sm:$0xf]
    %v225 = vld [vmem:[#allocation6 + $0x8] sm:$0xf]
    %v226 = vld [vmem:[#allocation6 + $0xc] sm:$0xf]
    %v227 = vld [vmem:[#allocation6 + $0x10] sm:$0xf]
    %v228 = vld [vmem:[#allocation6 + $0x14] sm:$0xf]
    %v229 = vld [vmem:[#allocation6 + $0x18] sm:$0xf]
    %v230 = vld [vmem:[#allocation6 + $0x1c] sm:$0xf]
    %v231 = vld [vmem:[#allocation6 + $0x20] sm:$0xf]
    %v232 = vld [vmem:[#allocation6 + $0x24] sm:$0xf]
    %v233 = vld [vmem:[#allocation6 + $0x28] sm:$0xf]
    %v234 = vld [vmem:[#allocation6 + $0x2c] sm:$0xf]
    %v235 = vld [vmem:[#allocation6 + $0x30] sm:$0xf]
    %v236 = vld [vmem:[#allocation6 + $0x34] sm:$0xf]
    %v237 = vld [vmem:[#allocation6 + $0x38] sm:$0xf]
    %v238 = vld [vmem:[#allocation6 + $0x3c] sm:$0xf]
    %v239 = vld [vmem:[%s4] sm:$0x1]
    %v241 = vperm.slane %v239, 0
    %v259 = vunpack.c.l.b16 %v223
    %v260 = vunpack.c.l.b16 %v224
    %v261 = vunpack.c.l.b16 %v225
    %v262 = vunpack.c.l.b16 %v226
    %v263 = vunpack.c.l.b16 %v227
    %v264 = vunpack.c.l.b16 %v228
    %v265 = vunpack.c.l.b16 %v229
    %v266 = vunpack.c.l.b16 %v230
    %v267 = vunpack.c.l.b16 %v231
    %v268 = vunpack.c.l.b16 %v232
    %v269 = vunpack.c.l.b16 %v233
    %v270 = vunpack.c.l.b16 %v234
    %v271 = vunpack.c.l.b16 %v235
    %v272 = vunpack.c.l.b16 %v236
    %v273 = vunpack.c.l.b16 %v237
    %v274 = vunpack.c.l.b16 %v238
    %v275 = vpack.c.b16 %v260, %v259
    %v276 = vpack.c.b16 %v262, %v261
    %v277 = vpack.c.b16 %v264, %v263
    %v278 = vpack.c.b16 %v266, %v265
    %v279 = vpack.c.b16 %v268, %v267
    %v280 = vpack.c.b16 %v270, %v269
    %v281 = vpack.c.b16 %v272, %v271
    %v282 = vpack.c.b16 %v274, %v273
    %291 = vmatpush.bf16.msra.mxu0 %v282
    %292 = vmatpush.bf16.msra.mxu0 %v281
    %293 = vmatpush.bf16.msra.mxu0 %v280
    %294 = vmatpush.bf16.msra.mxu0 %v279
    %295 = vmatpush.bf16.msra.mxu0 %v278
    %296 = vmatpush.bf16.msra.mxu0 %v277
    %297 = vmatpush.bf16.msra.mxu0 %v276
    %298 = vmatpush.bf16.msra.mxu0 %v275
    %299 = vmatmul.bf16.gmra.mxu0 %v222
    %v300 = vpop.f32.mrf.mxu0
    %v301 = vadd.f32 %v241, %v300
    %v302 = vpop.f32.mrf.mxu0
    %303 = vdwg.mxu0
    %v304 = vpack.c.bf16 %v301, %v301
    %305 = vst [vmem:[%s5] sm:$0x1] %v304
    // Predicated region
    $region34: #{hangman_nn_forward.1} parent=1 // pred_check
      _
    $region35: #{hangman_nn_forward.1} parent=1 // pred_check_branch
      %307 = sbr.rel (0) target = $region37
    $region36: #{hangman_nn_forward.1} parent=1 // pred_region
      _
    $region37: #{hangman_nn_forward.1} parent=1 // pred_fallthru
      _
    // Predicated region
    $region38: #{hangman_nn_forward.1} parent=1 // pred_check
      _
    $region39: #{hangman_nn_forward.1} parent=1 // pred_check_branch
      %309 = sbr.rel (0) target = $region41
    $region40: #{hangman_nn_forward.1} parent=1 // pred_region
      _
    $region41: #{hangman_nn_forward.1} parent=1 // pred_fallthru
      _
    %310 = vsyncpa [#allocation3], 1
    %311 = vsyncpa [#allocation5], 1

</llo_original>
